<compile_context>
chip_gen: v7x
topology: tpu7x:2x2x1
jax: 0.10.0
libtpu: 0.0.40
codegen_flags: <defaults>
</compile_context>

<pallas_src>
import functools

import jax
import jax.numpy as jnp
from jax.experimental import pallas as pl
from jax.experimental.pallas import tpu as pltpu


# ----------------------------- Pallas kernel --------------------------------

def _deconv_bn_lrelu_kernel(xa_ref, xb_ref, wa_ref, wb_ref, shift_ref, o_ref,
                            *, alpha):
    # xa_ref/xb_ref: (1, 1, H*W, Cin)  bf16 input depth slices od and od+1
    # wa_ref/wb_ref: (Cin, 4*Cout)     bf16 BN-folded transposed-conv taps
    #                                  (kd=1 applies to x[od], kd=0 to x[od+1])
    # shift_ref:     (1, 4*Cout)       f32 conv-bias + eval-BN shift
    # o_ref:         (1, 1, H*W, 4*Cout) f32, columns ordered (ph, pw, co)
    y = jnp.dot(xa_ref[0, 0], wa_ref[...], preferred_element_type=jnp.float32)
    y += jnp.dot(xb_ref[0, 0], wb_ref[...], preferred_element_type=jnp.float32)
    y += shift_ref[...]
    o_ref[0, 0] = jnp.where(y > 0.0, y, alpha * y)


# ------------------------------ wrapper --------------------------------------

def deconv3d_forward(x, params, *, eps=1e-5, alpha=0.01):
    """x: (N, Cin, D, H, W) NCDHW -> (N, Cout, D-1, 2H, 2W) NCDHW (f32)."""
    w = params["weight"]                    # (Cin, Cout, 2, 2, 2) PyTorch layout
    bias = params["bias"]                   # (Cout,)
    gamma, beta = params["gamma"], params["beta"]
    mean, var = params["running_mean"], params["running_var"]

    N, Ci, D, H, W = x.shape
    Co = w.shape[1]
    Do = D - 1
    HW = H * W

    # Fold eval-mode BatchNorm (+ conv bias) into the weights / per-column shift.
    s = gamma / jnp.sqrt(var + eps)                             # (Cout,)
    shift = (bias - mean) * s + beta                            # (Cout,)
    shift4 = jnp.tile(shift, 4)[None, :].astype(jnp.float32)    # (1, 4*Cout)

    def pack(kd):
        wk = w[:, :, kd] * s[None, :, None, None]               # (Cin, Cout, 2, 2)
        wk = jnp.transpose(wk, (0, 2, 3, 1)).reshape(Ci, 4 * Co)  # (ph, pw, co) cols
        return wk.astype(jnp.bfloat16)

    wa = pack(1)   # multiplies x[:, od]
    wb = pack(0)   # multiplies x[:, od + 1]

    # NCDHW -> (N, D, H*W, Cin); bf16 matmul operands, f32 accumulation.
    xr = jnp.transpose(x, (0, 2, 3, 4, 1)).reshape(N, D, HW, Ci).astype(jnp.bfloat16)

    out = pl.pallas_call(
        functools.partial(_deconv_bn_lrelu_kernel, alpha=alpha),
        out_shape=jax.ShapeDtypeStruct((N, Do, HW, 4 * Co), jnp.float32),
        grid_spec=pltpu.PrefetchScalarGridSpec(
            num_scalar_prefetch=0,
            grid=(N, Do),
            in_specs=[
                pl.BlockSpec((1, 1, HW, Ci), lambda n, d: (n, d, 0, 0)),
                pl.BlockSpec((1, 1, HW, Ci), lambda n, d: (n, d + 1, 0, 0)),
                pl.BlockSpec((Ci, 4 * Co), lambda n, d: (0, 0)),
                pl.BlockSpec((Ci, 4 * Co), lambda n, d: (0, 0)),
                pl.BlockSpec((1, 4 * Co), lambda n, d: (0, 0)),
            ],
            out_specs=pl.BlockSpec((1, 1, HW, 4 * Co), lambda n, d: (n, d, 0, 0)),
        ),
        compiler_params=pltpu.CompilerParams(
            dimension_semantics=("parallel", "parallel")),
    )(xr, xr, wa, wb, shift4)

    # Pixel-shuffle the packed (ph, pw, co) columns into 2H x 2W and return the
    # PyTorch NCDHW layout (pure layout plumbing outside the kernel).
    out = out.reshape(N, Do, H, W, 2, 2, Co)
    out = jnp.transpose(out, (0, 1, 2, 4, 3, 5, 6)).reshape(N, Do, 2 * H, 2 * W, Co)
    return jnp.transpose(out, (0, 4, 1, 2, 3))


# --------------------------- pure-JAX reference -------------------------------

def deconv3d_ref(x, params, *, eps=1e-5, alpha=0.01):
    """Independent f32 scatter-form ConvTranspose3d + BN(eval) + LeakyReLU."""
    w = params["weight"]; bias = params["bias"]
    gamma, beta = params["gamma"], params["beta"]
    mean, var = params["running_mean"], params["running_var"]
    N, Ci, D, H, W = x.shape
    Co = w.shape[1]
    buf = jnp.zeros((N, Co, D + 1, 2 * H, 2 * W), jnp.float32)
    for kd in range(2):
        for kh in range(2):
            for kw in range(2):
                contrib = jnp.einsum("nidhw,io->nodhw", x, w[:, :, kd, kh, kw])
                buf = buf.at[:, :, kd:kd + D, kh::2, kw::2].add(contrib)
    y = buf[:, :, 1:D] + bias[None, :, None, None, None]
    s = (gamma / jnp.sqrt(var + eps))[None, :, None, None, None]
    y = (y - mean[None, :, None, None, None]) * s + beta[None, :, None, None, None]
    return jnp.where(y > 0.0, y, alpha * y)


# --------------------------------- main ---------------------------------------

if __name__ == "__main__":
    key = jax.random.PRNGKey(0)
    N, Cin, Cout, D, H, W = 2, 32, 32, 4, 16, 16
    k = jax.random.split(key, 7)

    fan_in = Cin * 2 * 2 * 2
    params = {
        "weight": jax.random.normal(k[0], (Cin, Cout, 2, 2, 2), jnp.float32)
                  * jnp.sqrt(2.0 / fan_in),
        "bias": 0.1 * jax.random.normal(k[1], (Cout,), jnp.float32),
        "gamma": jax.random.uniform(k[2], (Cout,), jnp.float32, 0.5, 1.5),
        "beta": 0.1 * jax.random.normal(k[3], (Cout,), jnp.float32),
        "running_mean": 0.1 * jax.random.normal(k[4], (Cout,), jnp.float32),
        "running_var": jax.random.uniform(k[5], (Cout,), jnp.float32, 0.5, 1.5),
    }
    x = jax.random.normal(k[6], (N, Cin, D, H, W), jnp.float32)

    out = jax.jit(deconv3d_forward)(x, params)
    out = jax.block_until_ready(out)
    assert out.shape == (N, Cout, D - 1, 2 * H, 2 * W), out.shape
    assert bool(jnp.all(jnp.isfinite(out)))

    ref = deconv3d_ref(x, params)
    # bf16 MXU operands vs pure-f32 reference -> loose tolerance.
    assert bool(jnp.allclose(out, ref, atol=1e-1, rtol=1e-1)), float(
        jnp.max(jnp.abs(out - ref)))

    print("KERNEL_OK")
</pallas_src>

<mosaic_0001>
module attributes {stable_mosaic.version = 11 : i64} {
  func.func @_deconv_bn_lrelu_kernel(%arg0: i32, %arg1: i32, %arg2: memref<1x1x256x32xbf16, #tpu.memory_space<vmem>>, %arg3: memref<1x1x256x32xbf16, #tpu.memory_space<vmem>>, %arg4: memref<32x128xbf16, #tpu.memory_space<vmem>>, %arg5: memref<32x128xbf16, #tpu.memory_space<vmem>>, %arg6: memref<1x128xf32, #tpu.memory_space<vmem>>, %arg7: memref<1x1x256x128xf32, #tpu.memory_space<vmem>>) attributes {dimension_semantics = [#tpu.dimension_semantics<parallel>, #tpu.dimension_semantics<parallel>], iteration_bounds = array<i64: 2, 3>, scalar_prefetch = 0 : i64, scratch_operands = 0 : i64, tpu.core_type = #tpu.core_type<tc>, window_params = [{transform_indices = @transform_0, window_bounds = array<i64: 1, 1, 256, 32>}, {transform_indices = @transform_1, window_bounds = array<i64: 1, 1, 256, 32>}, {pipeline_mode = #tpu.pipeline_mode<synchronous>, transform_indices = @transform_2, window_bounds = array<i64: 32, 128>}, {pipeline_mode = #tpu.pipeline_mode<synchronous>, transform_indices = @transform_3, window_bounds = array<i64: 32, 128>}, {pipeline_mode = #tpu.pipeline_mode<synchronous>, transform_indices = @transform_4, window_bounds = array<i64: 1, 128>}, {transform_indices = @transform_5, window_bounds = array<i64: 1, 1, 256, 128>}]} {
    %c0 = arith.constant 0 : index
    %c0_0 = arith.constant 0 : index
    %c0_1 = arith.constant 0 : index
    %c0_2 = arith.constant 0 : index
    %0 = vector.load %arg2[%c0, %c0_0, %c0_1, %c0_2] : memref<1x1x256x32xbf16, #tpu.memory_space<vmem>>, vector<1x1x256x32xbf16>
    %1 = vector.shape_cast %0 : vector<1x1x256x32xbf16> to vector<256x32xbf16>
    %c0_3 = arith.constant 0 : index
    %c0_4 = arith.constant 0 : index
    %2 = vector.load %arg4[%c0_3, %c0_4] : memref<32x128xbf16, #tpu.memory_space<vmem>>, vector<32x128xbf16>
    %cst = arith.constant dense<0.000000e+00> : vector<256x128xf32>
    %3 = tpu.matmul %1, %2, %cst {dimension_numbers = #tpu.dot_dimension_numbers<[1], [0], [0], [1], [0, 0, 1, 1], [], []>} : vector<256x32xbf16>, vector<32x128xbf16>, vector<256x128xf32> -> vector<256x128xf32>
    %c0_5 = arith.constant 0 : index
    %c0_6 = arith.constant 0 : index
    %c0_7 = arith.constant 0 : index
    %c0_8 = arith.constant 0 : index
    %4 = vector.load %arg3[%c0_5, %c0_6, %c0_7, %c0_8] : memref<1x1x256x32xbf16, #tpu.memory_space<vmem>>, vector<1x1x256x32xbf16>
    %5 = vector.shape_cast %4 : vector<1x1x256x32xbf16> to vector<256x32xbf16>
    %c0_9 = arith.constant 0 : index
    %c0_10 = arith.constant 0 : index
    %6 = vector.load %arg5[%c0_9, %c0_10] : memref<32x128xbf16, #tpu.memory_space<vmem>>, vector<32x128xbf16>
    %cst_11 = arith.constant dense<0.000000e+00> : vector<256x128xf32>
    %7 = tpu.matmul %5, %6, %cst_11 {dimension_numbers = #tpu.dot_dimension_numbers<[1], [0], [0], [1], [0, 0, 1, 1], [], []>} : vector<256x32xbf16>, vector<32x128xbf16>, vector<256x128xf32> -> vector<256x128xf32>
    %8 = arith.addf %3, %7 : vector<256x128xf32>
    %c0_12 = arith.constant 0 : index
    %c0_13 = arith.constant 0 : index
    %9 = vector.load %arg6[%c0_12, %c0_13] : memref<1x128xf32, #tpu.memory_space<vmem>>, vector<1x128xf32>
    %10 = vector.broadcast %9 : vector<1x128xf32> to vector<256x128xf32>
    %11 = arith.addf %8, %10 : vector<256x128xf32>
    %cst_14 = arith.constant 0.000000e+00 : f32
    %12 = vector.broadcast %cst_14 : f32 to vector<256x128xf32>
    %13 = arith.cmpf ogt, %11, %12 : vector<256x128xf32>
    %cst_15 = arith.constant 0.00999999977 : f32
    %14 = vector.broadcast %cst_15 : f32 to vector<256x128xf32>
    %15 = arith.mulf %14, %11 : vector<256x128xf32>
    %16 = arith.select %13, %11, %15 : vector<256x128xi1>, vector<256x128xf32>
    %c0_16 = arith.constant 0 : index
    %c0_17 = arith.constant 0 : index
    %c0_18 = arith.constant 0 : index
    %c0_19 = arith.constant 0 : index
    %17 = vector.load %arg7[%c0_16, %c0_17, %c0_18, %c0_19] : memref<1x1x256x128xf32, #tpu.memory_space<vmem>>, vector<1x1x256x128xf32>
    %18 = vector.shape_cast %17 : vector<1x1x256x128xf32> to vector<256x128xf32>
    %19 = vector.shape_cast %16 : vector<256x128xf32> to vector<1x1x256x128xf32>
    tpu.vector_store %arg7[%c0_16, %c0_17, %c0_18, %c0_19], %19 {strides = array<i32>} : memref<1x1x256x128xf32, #tpu.memory_space<vmem>>, vector<1x1x256x128xf32>,
    return
  }
  func.func @transform_0(%arg0: i32, %arg1: i32) -> (i32, i32, i32, i32) {
    %c0_i32 = arith.constant 0 : i32
    %c0_i32_0 = arith.constant 0 : i32
    %c0_i32_1 = arith.constant 0 : i32
    return %arg0, %arg1, %c0_i32, %c0_i32_0 : i32, i32, i32, i32
  }
  func.func @transform_1(%arg0: i32, %arg1: i32) -> (i32, i32, i32, i32) {
    %c1_i32 = arith.constant 1 : i32
    %0 = arith.addi %arg1, %c1_i32 : i32
    %c0_i32 = arith.constant 0 : i32
    %c0_i32_0 = arith.constant 0 : i32
    %c0_i32_1 = arith.constant 0 : i32
    return %arg0, %0, %c0_i32, %c0_i32_0 : i32, i32, i32, i32
  }
  func.func @transform_2(%arg0: i32, %arg1: i32) -> (i32, i32) {
    %c0_i32 = arith.constant 0 : i32
    %c0_i32_0 = arith.constant 0 : i32
    %c0_i32_1 = arith.constant 0 : i32
    return %c0_i32, %c0_i32_0 : i32, i32
  }
  func.func @transform_3(%arg0: i32, %arg1: i32) -> (i32, i32) {
    %c0_i32 = arith.constant 0 : i32
    %c0_i32_0 = arith.constant 0 : i32
    %c0_i32_1 = arith.constant 0 : i32
    return %c0_i32, %c0_i32_0 : i32, i32
  }
  func.func @transform_4(%arg0: i32, %arg1: i32) -> (i32, i32) {
    %c0_i32 = arith.constant 0 : i32
    %c0_i32_0 = arith.constant 0 : i32
    %c0_i32_1 = arith.constant 0 : i32
    return %c0_i32, %c0_i32_0 : i32, i32
  }
  func.func @transform_5(%arg0: i32, %arg1: i32) -> (i32, i32, i32, i32) {
    %c0_i32 = arith.constant 0 : i32
    %c0_i32_0 = arith.constant 0 : i32
    %c0_i32_1 = arith.constant 0 : i32
    return %arg0, %arg1, %c0_i32, %c0_i32_0 : i32, i32, i32, i32
  }
}

</mosaic_0001>

<llo_original>
// kernel: tile.8
$region0: #{tile.8}
  #allocation0 [shape = 's32[1]{0}', space=sflag, size = 0x4, scoped, tag = 'scoped memory for tile.8']
  %s0 = inlined_call_operand.vmem [shape: f32[32], index: 0, kind: input, shape index: {}]
  %s1 = inlined_call_operand.vmem [shape: f32[4,32], index: 1, kind: output, shape index: {}]
  // Predicated region
  $region2: #{tile.8} parent=0 // pred_check
    _
  $region3: #{tile.8} parent=0 // pred_check_branch
    %3 = sbr.rel (0) target = $region5
  $region4: #{tile.8} parent=0 // pred_region
    _
  $region5: #{tile.8} parent=0 // pred_fallthru
    _
  %v4 = vld [vmem:[%s0] ss:$0 sm:$0xff]
  %5 = vst [vmem:[%s1] sm:$0xf] %v4

// kernel: tile.9
$region0: #{tile.9}
  %s0 = inlined_call_operand.vmem [shape: f32[4,32], index: 0, kind: input, shape index: {}]
  %s1 = inlined_call_operand.vmem [shape: f32[1,128], index: 1, kind: output, shape index: {}]
  $region1: #{tile.9} parent=0
    #allocation0 [shape = 'u8[4096]{0}', space=vmem, size = 0x1000, scoped, tag = 'scoped mem for output reshape']
    #allocation1 [shape = 'u8[4096]{0}', space=vmem, size = 0x1000, scoped, tag = 'scoped mem for input reshape']
    %s3 = sshllo.u32 0, 4
    %v4 = vld [vmem:[%s0] sm:%s3]
    %5 = vst [vmem:[#allocation1] sm:%s3] %v4
    %v6 = vld [vmem:[#allocation1] sm:$0x1]
    %vm7 = vcmask 261120
    %8 = vst.msk [vmem:[#allocation0] sm:$0x1] %vm7, %v6
    %s9 = scalar_lea.vmem [#allocation1], 3
    %v10 = vld [vmem:[%s9] sm:$0x1]
    %11 = vrot.lane.b32.xlu0 %v10, 96
    %v12 = vpop.permute.xlu0 %11
    %vm13 = vcmask 1048320
    %14 = vst.msk [vmem:[#allocation0] sm:$0x1] %vm13, %v12
    %s15 = scalar_lea.vmem [#allocation1], 2
    %v16 = vld [vmem:[%s15] sm:$0x1]
    %17 = vrot.lane.b32.xlu0 %v16, 64
    %v18 = vpop.permute.xlu0 %17
    %vm19 = vcmask 785920
    %20 = vst.msk [vmem:[#allocation0] sm:$0x1] %vm19, %v18
    %s21 = scalar_lea.vmem [#allocation1], 1
    %v22 = vld [vmem:[%s21] sm:$0x1]
    %23 = vrot.lane.b32.xlu0 %v22, 32
    %v24 = vpop.permute.xlu0 %23
    %vm25 = vcmask 523520
    %26 = vst.msk [vmem:[#allocation0] sm:$0x1] %vm25, %v24
    %s28 = sshllo.u32 0, 1
    %v30 = vld [vmem:[#allocation0] sm:%s28]
    %s31 = sshllo.u32 0, 1
    %32 = vst [vmem:[%s1] sm:%s31] %v30

// kernel: deconv3d_forward.1
$region0: #{deconv3d_forward.1}
  #allocation0 [shape = 'u32[]', space=smem, size = 0x4, offset = 0x4, fixed_abs, tag = 'smem constant byte address 0x4 - core index']
  #allocation1 [shape = 'u32[144,128]{1,0:T(1,128)}', space=vmem, size = 0x12000, scoped, tag = 'internal scratch']
  %s0 = inlined_call_operand.vmem [shape: bf16[2,4,256,32], index: 0, kind: input, shape index: {}, may-alias: {0,1}]
  %s1 = inlined_call_operand.vmem [shape: bf16[2,4,256,32], index: 1, kind: input, shape index: {}, may-alias: {0,1}]
  %s2 = inlined_call_operand.vmem [shape: bf16[32,128], index: 2, kind: input, shape index: {}]
  %s3 = inlined_call_operand.vmem [shape: bf16[32,128], index: 3, kind: input, shape index: {}]
  %s4 = inlined_call_operand.vmem [shape: f32[1,128], index: 4, kind: input, shape index: {}]
  %s5 = inlined_call_operand.vmem [shape: f32[2,3,256,128], index: 5, kind: output, shape index: {}]
  %s6 = sld [smem:[#allocation0]]
  $region53: #{deconv3d_forward.1} parent=0
    _
  %s8 = ssub.s32 1, %s6
  %s9 = scalar_select 0, %s8, %s6
  loop: start=0, step=1, limit=8
  $region2: #{deconv3d_forward.1} parent=0 // loop_pre_header
    _
  $region3: #{deconv3d_forward.1} parent=0 // loop_header
    %s11 = sphi 0, %s15
    %p12 = scmp.ge.s32.totalorder %s11, 8
    %s18 = sphi 0, %s30
    %s19 = sphi 0, %s26
    %s20 = sphi 0, %s18
    %s21 = sphi 0, %s19
    %s22 = sphi 0, %s20
    %s23 = sphi 0, %s21
    %s35 = sphi 0, %s37
    %s38 = sphi 0, %s35
    %s39 = sphi 0, %s38
    %s55 = sphi 0, %s39
    %s65 = sphi 0, %s67
    %s68 = sphi 0, %s65
    %s69 = sphi 0, %s68
    %s85 = sphi 0, %s69
    %s89 = sphi 0, %s89
    %s91 = sphi 0, %s89
    %s92 = sphi 0, %s91
    %s106 = sphi 0, %s92
    %s110 = sphi 0, %s110
    %s112 = sphi 0, %s110
    %s113 = sphi 0, %s112
    %s127 = sphi 0, %s113
    %s131 = sphi 0, %s131
    %s133 = sphi 0, %s131
    %s134 = sphi 0, %s133
    %s148 = sphi 0, %s134
    %s156 = sphi 0, %s158
    %s159 = sphi 0, %s156
    %s160 = sphi 0, %s159
    %s176 = sphi 0, %s160
  $region4: #{deconv3d_forward.1} parent=0 // loop_header_branch
    %14 = sbr.rel (%p12) target = $region8
  $region5: #{deconv3d_forward.1} parent=0 // loop_body
    %s16 = ssub.s32 %s11, 1
    %s17 = ssub.s32 %s11, 2
    %s24 = sadd.s32 1, %s19
    %p25 = scmp.ge.s32.totalorder %s24, 3
    %s26 = scalar_select %p25, 0, %s24
    %s27 = sadd.s32 1, %s18
    %s28 = scalar_select %p25, %s27, %s18
    %p29 = scmp.ge.s32.totalorder %s28, 2
    %s30 = scalar_select %p29, 0, %s28
    %s31 = ssub.s32 %s18, %s30
    %s32 = ssub.s32 %s19, %s26
    %s33 = sor.u32 %s31, %s32
    %p34 = scmp.eq.s32.totalorder %s33, 0
    %s36 = sadd.s32 %s35, 1
    %s37 = scalar_select %p34, %s35, %s36
    %p40 = pneg %p34
    %p41 = scmp.eq.s32.totalorder %s11, 5
    %p42 = por %p40, %p41
    %p43 = scmp.ne.s32.totalorder %s35, %s38
    %p44 = scmp.eq.s32.totalorder %s11, 0
    %p45 = por %p43, %p44
    %p46 = scmp.ne.s32.totalorder %s35, %s38
    %p47 = scmp.eq.s32.totalorder %s16, 5
    %p48 = por %p46, %p47
    %p49 = scmp.ne.s32.totalorder %s38, %s39
    %p50 = scmp.eq.s32.totalorder %s16, 0
    %p51 = por %p49, %p50
    %p52 = scmp.ne.s32.totalorder %s38, %s39
    %p53 = scmp.eq.s32.totalorder %s17, 5
    %p54 = por %p52, %p53
    %p56 = scmp.ne.s32.totalorder %s39, %s55
    %p57 = scmp.eq.s32.totalorder %s17, 0
    %p58 = por %p56, %p57
    %s59 = sadd.s32 %s19, 1
    %s60 = sadd.s32 %s26, 1
    %s61 = ssub.s32 %s18, %s30
    %s62 = ssub.s32 %s59, %s60
    %s63 = sor.u32 %s61, %s62
    %p64 = scmp.eq.s32.totalorder %s63, 0
    %s66 = sadd.s32 %s65, 1
    %s67 = scalar_select %p64, %s65, %s66
    %p70 = pneg %p64
    %p71 = scmp.eq.s32.totalorder %s11, 5
    %p72 = por %p70, %p71
    %p73 = scmp.ne.s32.totalorder %s65, %s68
    %p74 = scmp.eq.s32.totalorder %s11, 0
    %p75 = por %p73, %p74
    %p76 = scmp.ne.s32.totalorder %s65, %s68
    %p77 = scmp.eq.s32.totalorder %s16, 5
    %p78 = por %p76, %p77
    %p79 = scmp.ne.s32.totalorder %s68, %s69
    %p80 = scmp.eq.s32.totalorder %s16, 0
    %p81 = por %p79, %p80
    %p82 = scmp.ne.s32.totalorder %s68, %s69
    %p83 = scmp.eq.s32.totalorder %s17, 5
    %p84 = por %p82, %p83
    %p86 = scmp.ne.s32.totalorder %s69, %s85
    %p87 = scmp.eq.s32.totalorder %s17, 0
    %p88 = por %p86, %p87
    %s90 = sadd.s32 %s89, 1
    %p93 = scmp.eq.s32.totalorder %s11, 5
    %p94 = scmp.ne.s32.totalorder %s89, %s91
    %p95 = scmp.eq.s32.totalorder %s11, 0
    %p96 = por %p94, %p95
    %p97 = scmp.ne.s32.totalorder %s89, %s91
    %p98 = scmp.eq.s32.totalorder %s16, 5
    %p99 = por %p97, %p98
    %p100 = scmp.ne.s32.totalorder %s91, %s92
    %p101 = scmp.eq.s32.totalorder %s16, 0
    %p102 = por %p100, %p101
    %p103 = scmp.ne.s32.totalorder %s91, %s92
    %p104 = scmp.eq.s32.totalorder %s17, 5
    %p105 = por %p103, %p104
    %p107 = scmp.ne.s32.totalorder %s92, %s106
    %p108 = scmp.eq.s32.totalorder %s17, 0
    %p109 = por %p107, %p108
    %s111 = sadd.s32 %s110, 1
    %p114 = scmp.eq.s32.totalorder %s11, 5
    %p115 = scmp.ne.s32.totalorder %s110, %s112
    %p116 = scmp.eq.s32.totalorder %s11, 0
    %p117 = por %p115, %p116
    %p118 = scmp.ne.s32.totalorder %s110, %s112
    %p119 = scmp.eq.s32.totalorder %s16, 5
    %p120 = por %p118, %p119
    %p121 = scmp.ne.s32.totalorder %s112, %s113
    %p122 = scmp.eq.s32.totalorder %s16, 0
    %p123 = por %p121, %p122
    %p124 = scmp.ne.s32.totalorder %s112, %s113
    %p125 = scmp.eq.s32.totalorder %s17, 5
    %p126 = por %p124, %p125
    %p128 = scmp.ne.s32.totalorder %s113, %s127
    %p129 = scmp.eq.s32.totalorder %s17, 0
    %p130 = por %p128, %p129
    %s132 = sadd.s32 %s131, 1
    %p135 = scmp.eq.s32.totalorder %s11, 5
    %p136 = scmp.ne.s32.totalorder %s131, %s133
    %p137 = scmp.eq.s32.totalorder %s11, 0
    %p138 = por %p136, %p137
    %p139 = scmp.ne.s32.totalorder %s131, %s133
    %p140 = scmp.eq.s32.totalorder %s16, 5
    %p141 = por %p139, %p140
    %p142 = scmp.ne.s32.totalorder %s133, %s134
    %p143 = scmp.eq.s32.totalorder %s16, 0
    %p144 = por %p142, %p143
    %p145 = scmp.ne.s32.totalorder %s133, %s134
    %p146 = scmp.eq.s32.totalorder %s17, 5
    %p147 = por %p145, %p146
    %p149 = scmp.ne.s32.totalorder %s134, %s148
    %p150 = scmp.eq.s32.totalorder %s17, 0
    %p151 = por %p149, %p150
    %s152 = ssub.s32 %s18, %s30
    %s153 = ssub.s32 %s19, %s26
    %s154 = sor.u32 %s152, %s153
    %p155 = scmp.eq.s32.totalorder %s154, 0
    %s157 = sadd.s32 %s156, 1
    %s158 = scalar_select %p155, %s156, %s157
    %p161 = pneg %p155
    %p162 = scmp.eq.s32.totalorder %s11, 5
    %p163 = por %p161, %p162
    %p164 = scmp.ne.s32.totalorder %s156, %s159
    %p165 = scmp.eq.s32.totalorder %s11, 0
    %p166 = por %p164, %p165
    %p167 = scmp.ne.s32.totalorder %s156, %s159
    %p168 = scmp.eq.s32.totalorder %s16, 5
    %p169 = por %p167, %p168
    %p170 = scmp.ne.s32.totalorder %s159, %s160
    %p171 = scmp.eq.s32.totalorder %s16, 0
    %p172 = por %p170, %p171
    %p173 = scmp.ne.s32.totalorder %s159, %s160
    %p174 = scmp.eq.s32.totalorder %s17, 5
    %p175 = por %p173, %p174
    %p177 = scmp.ne.s32.totalorder %s160, %s176
    %p178 = scmp.eq.s32.totalorder %s17, 0
    %p179 = por %p177, %p178
    %p180 = scmp.le.s32.totalorder 1, %s11
    %p181 = scmp.lt.s32.totalorder %s11, 7
    %p182 = pnand %p180, %p181
    %p183 = pneg %p182
    // Predicated region
    $region9: #{deconv3d_forward.1} parent=5 // pred_check
      _
    $region10: #{deconv3d_forward.1} parent=5 // pred_check_branch
      %185 = sbr.rel (%p182) target = $region12
    $region11: #{deconv3d_forward.1} parent=5 // pred_region
      %s186 = ssub.s32 %s11, 1
      // Predicated region
      $region13: #{deconv3d_forward.1} parent=11 // pred_check
        %p187 = pneg %p102
      $region14: #{deconv3d_forward.1} parent=11 // pred_check_branch
        %189 = sbr.rel (%p187) target = $region16
      $region15: #{deconv3d_forward.1} parent=11 // pred_region
        _
      $region16: #{deconv3d_forward.1} parent=11 // pred_fallthru
        _
      // Predicated region
      $region17: #{deconv3d_forward.1} parent=11 // pred_check
        %p190 = pneg %p123
      $region18: #{deconv3d_forward.1} parent=11 // pred_check_branch
        %192 = sbr.rel (%p190) target = $region20
      $region19: #{deconv3d_forward.1} parent=11 // pred_region
        _
      $region20: #{deconv3d_forward.1} parent=11 // pred_fallthru
        _
      // Predicated region
      $region21: #{deconv3d_forward.1} parent=11 // pred_check
        %p193 = pneg %p144
      $region22: #{deconv3d_forward.1} parent=11 // pred_check_branch
        %195 = sbr.rel (%p193) target = $region24
      $region23: #{deconv3d_forward.1} parent=11 // pred_region
        _
      $region24: #{deconv3d_forward.1} parent=11 // pred_fallthru
        _
    $region12: #{deconv3d_forward.1} parent=5 // pred_fallthru
      _
    %p196 = scmp.lt.s32.totalorder %s11, 6
    // Predicated region
    $region25: #{deconv3d_forward.1} parent=5 // pred_check
      %p197 = pneg %p196
    $region26: #{deconv3d_forward.1} parent=5 // pred_check_branch
      %199 = sbr.rel (%p197) target = $region28
    $region27: #{deconv3d_forward.1} parent=5 // pred_region
      // Predicated region
      $region29: #{deconv3d_forward.1} parent=27 // pred_check
        %p200 = pneg %p45
      $region30: #{deconv3d_forward.1} parent=27 // pred_check_branch
        %202 = sbr.rel (%p200) target = $region32
      $region31: #{deconv3d_forward.1} parent=27 // pred_region
        %p203 = scmp.lt.s32.totalorder %s18, 1
        %s204 = scalar_select %p203, %s18, 1
        %p205 = scmp.lt.s32.totalorder %s19, 3
        %s206 = scalar_select %p205, %s19, 3
        %s207 = smul.addr %s206, 32
        %s208 = smul.addr %s204, 128
        %s209 = sadd.s32 %s207, %s208
        %s210 = smul.addr %s209, 4
        %s211 = scalar_lea.vmem %s0, %s210
      $region32: #{deconv3d_forward.1} parent=27 // pred_fallthru
        _
      // Predicated region
      $region33: #{deconv3d_forward.1} parent=27 // pred_check
        %p212 = pneg %p75
      $region34: #{deconv3d_forward.1} parent=27 // pred_check_branch
        %214 = sbr.rel (%p212) target = $region36
      $region35: #{deconv3d_forward.1} parent=27 // pred_region
        %s215 = sadd.s32 %s19, 1
        %p216 = scmp.lt.s32.totalorder %s18, 1
        %s217 = scalar_select %p216, %s18, 1
        %p218 = scmp.lt.s32.totalorder %s215, 3
        %s219 = scalar_select %p218, %s215, 3
        %s220 = smul.addr %s219, 32
        %s221 = smul.addr %s217, 128
        %s222 = sadd.s32 %s220, %s221
        %s223 = smul.addr %s222, 4
        %s224 = scalar_lea.vmem %s1, %s223
        %s225 = sadd.s32 %s19, 1
      $region36: #{deconv3d_forward.1} parent=27 // pred_fallthru
        _
    $region28: #{deconv3d_forward.1} parent=5 // pred_fallthru
      _
    %p226 = scmp.le.s32.totalorder 1, %s11
    %p227 = scmp.lt.s32.totalorder %s11, 7
    %p228 = pnand %p226, %p227
    %p229 = pneg %p228
    // Predicated region
    $region37: #{deconv3d_forward.1} parent=5 // pred_check
      _
    $region38: #{deconv3d_forward.1} parent=5 // pred_check_branch
      %231 = sbr.rel (%p228) target = $region40
    $region39: #{deconv3d_forward.1} parent=5 // pred_region
      %s232 = ssub.s32 %s11, 1
      %p233 = scmp.lt.s32.totalorder %s20, 1
      %s234 = scalar_select %p233, %s20, 1
      %p235 = scmp.lt.s32.totalorder %s21, 3
      %s236 = scalar_select %p235, %s21, 3
      %s237 = smul.addr %s236, 32
      %s238 = smul.addr %s234, 128
      %s239 = sadd.s32 %s237, %s238
      %s240 = smul.addr %s239, 4
      %s241 = scalar_lea.vmem %s0, %s240
      %p242 = pneg %p51
      %p243 = pneg %p48
      %s244 = sadd.s32 %s21, 1
      %p245 = scmp.lt.s32.totalorder %s20, 1
      %s246 = scalar_select %p245, %s20, 1
      %p247 = scmp.lt.s32.totalorder %s244, 3
      %s248 = scalar_select %p247, %s244, 3
      %s249 = smul.addr %s248, 32
      %s250 = smul.addr %s246, 128
      %s251 = sadd.s32 %s249, %s250
      %s252 = smul.addr %s251, 4
      %s253 = scalar_lea.vmem %s1, %s252
      %p254 = pneg %p81
      %p255 = pneg %p78
      %p256 = pneg %p102
      %p257 = pneg %p99
      %p258 = pneg %p123
      %p259 = pneg %p120
      %p260 = pneg %p144
      %p261 = pneg %p141
      %p262 = pneg %p172
      %p263 = pneg %p169
      %p264 = scmp.lt.s32.totalorder %s20, 1
      %s265 = scalar_select %p264, %s20, 1
      %p266 = scmp.lt.s32.totalorder %s21, 2
      %s267 = scalar_select %p266, %s21, 2
      %s268 = smul.addr %s267, 32
      %s269 = smul.addr %s265, 96
      %s270 = sadd.s32 %s268, %s269
      %s271 = smul.addr %s270, 8
      %s272 = scalar_lea.vmem %s5, %s271
      %p273 = scmp.lt.s32.totalorder %s20, 1
      %s274 = scalar_select %p273, %s20, 1
      %p275 = scmp.lt.s32.totalorder %s21, 3
      %s276 = scalar_select %p275, %s21, 3
      %s277 = smul.addr %s276, 32
      %s278 = smul.addr %s274, 128
      %s279 = sadd.s32 %s277, %s278
      %s280 = smul.addr %s279, 4
      %s281 = scalar_lea.vmem %s0, %s280
      %s282 = sadd.s32 %s21, 1
      %p283 = scmp.lt.s32.totalorder %s20, 1
      %s284 = scalar_select %p283, %s20, 1
      %p285 = scmp.lt.s32.totalorder %s282, 3
      %s286 = scalar_select %p285, %s282, 3
      %s287 = smul.addr %s286, 32
      %s288 = smul.addr %s284, 128
      %s289 = sadd.s32 %s287, %s288
      %s290 = smul.addr %s289, 4
      %s291 = scalar_lea.vmem %s1, %s290
      %s292 = sadd.s32 %s21, 1
      %p293 = scmp.lt.s32.totalorder %s20, 1
      %s294 = scalar_select %p293, %s20, 1
      %p295 = scmp.lt.s32.totalorder %s21, 2
      %s296 = scalar_select %p295, %s21, 2
      %s297 = smul.addr %s296, 32
      %s298 = smul.addr %s294, 96
      %s299 = sadd.s32 %s297, %s298
      %s300 = smul.addr %s299, 8
      %s301 = scalar_lea.vmem %s5, %s300
      %v303 = vld [vmem:[%s281] sm:$0xf]
      %v304 = vld [vmem:[%s281 + $0x4] sm:$0xf]
      %v305 = vld [vmem:[%s281 + $0x8] sm:$0xf]
      %v306 = vld [vmem:[%s281 + $0xc] sm:$0xf]
      %v307 = vld [vmem:[%s281 + $0x10] sm:$0xf]
      %v308 = vld [vmem:[%s281 + $0x14] sm:$0xf]
      %v309 = vld [vmem:[%s281 + $0x18] sm:$0xf]
      %v310 = vld [vmem:[%s281 + $0x1c] sm:$0xf]
      %v311 = vld [vmem:[%s281 + $0x20] sm:$0xf]
      %v312 = vld [vmem:[%s281 + $0x24] sm:$0xf]
      %v313 = vld [vmem:[%s281 + $0x28] sm:$0xf]
      %v314 = vld [vmem:[%s281 + $0x2c] sm:$0xf]
      %v315 = vld [vmem:[%s281 + $0x30] sm:$0xf]
      %v316 = vld [vmem:[%s281 + $0x34] sm:$0xf]
      %v317 = vld [vmem:[%s281 + $0x38] sm:$0xf]
      %v318 = vld [vmem:[%s281 + $0x3c] sm:$0xf]
      %v319 = vld [vmem:[%s281 + $0x40] sm:$0xf]
      %v320 = vld [vmem:[%s281 + $0x44] sm:$0xf]
      %v321 = vld [vmem:[%s281 + $0x48] sm:$0xf]
      %v322 = vld [vmem:[%s281 + $0x4c] sm:$0xf]
      %v323 = vld [vmem:[%s281 + $0x50] sm:$0xf]
      %v324 = vld [vmem:[%s281 + $0x54] sm:$0xf]
      %v325 = vld [vmem:[%s281 + $0x58] sm:$0xf]
      %v326 = vld [vmem:[%s281 + $0x5c] sm:$0xf]
      %v327 = vld [vmem:[%s281 + $0x60] sm:$0xf]
      %v328 = vld [vmem:[%s281 + $0x64] sm:$0xf]
      %v329 = vld [vmem:[%s281 + $0x68] sm:$0xf]
      %v330 = vld [vmem:[%s281 + $0x6c] sm:$0xf]
      %v331 = vld [vmem:[%s281 + $0x70] sm:$0xf]
      %v332 = vld [vmem:[%s281 + $0x74] sm:$0xf]
      %v333 = vld [vmem:[%s281 + $0x78] sm:$0xf]
      %v334 = vld [vmem:[%s281 + $0x7c] sm:$0xf]
      %v335 = vld [vmem:[%s2] sm:$0xf]
      %v336 = vld [vmem:[%s2 + $0x4] sm:$0xf]
      %v337 = vld [vmem:[%s2 + $0x8] sm:$0xf]
      %v338 = vld [vmem:[%s2 + $0xc] sm:$0xf]
      %v339 = vld [vmem:[%s291] sm:$0xf]
      %v340 = vld [vmem:[%s291 + $0x4] sm:$0xf]
      %v341 = vld [vmem:[%s291 + $0x8] sm:$0xf]
      %v342 = vld [vmem:[%s291 + $0xc] sm:$0xf]
      %v343 = vld [vmem:[%s291 + $0x10] sm:$0xf]
      %v344 = vld [vmem:[%s291 + $0x14] sm:$0xf]
      %v345 = vld [vmem:[%s291 + $0x18] sm:$0xf]
      %v346 = vld [vmem:[%s291 + $0x1c] sm:$0xf]
      %v347 = vld [vmem:[%s291 + $0x20] sm:$0xf]
      %v348 = vld [vmem:[%s291 + $0x24] sm:$0xf]
      %v349 = vld [vmem:[%s291 + $0x28] sm:$0xf]
      %v350 = vld [vmem:[%s291 + $0x2c] sm:$0xf]
      %v351 = vld [vmem:[%s291 + $0x30] sm:$0xf]
      %v352 = vld [vmem:[%s291 + $0x34] sm:$0xf]
      %v353 = vld [vmem:[%s291 + $0x38] sm:$0xf]
      %v354 = vld [vmem:[%s291 + $0x3c] sm:$0xf]
      %v355 = vld [vmem:[%s291 + $0x40] sm:$0xf]
      %v356 = vld [vmem:[%s291 + $0x44] sm:$0xf]
      %v357 = vld [vmem:[%s291 + $0x48] sm:$0xf]
      %v358 = vld [vmem:[%s291 + $0x4c] sm:$0xf]
      %v359 = vld [vmem:[%s291 + $0x50] sm:$0xf]
      %v360 = vld [vmem:[%s291 + $0x54] sm:$0xf]
      %v361 = vld [vmem:[%s291 + $0x58] sm:$0xf]
      %v362 = vld [vmem:[%s291 + $0x5c] sm:$0xf]
      %v363 = vld [vmem:[%s291 + $0x60] sm:$0xf]
      %v364 = vld [vmem:[%s291 + $0x64] sm:$0xf]
      %v365 = vld [vmem:[%s291 + $0x68] sm:$0xf]
      %v366 = vld [vmem:[%s291 + $0x6c] sm:$0xf]
      %v367 = vld [vmem:[%s291 + $0x70] sm:$0xf]
      %v368 = vld [vmem:[%s291 + $0x74] sm:$0xf]
      %v369 = vld [vmem:[%s291 + $0x78] sm:$0xf]
      %v370 = vld [vmem:[%s291 + $0x7c] sm:$0xf]
      %v371 = vld [vmem:[%s3] sm:$0xf]
      %v372 = vld [vmem:[%s3 + $0x4] sm:$0xf]
      %v373 = vld [vmem:[%s3 + $0x8] sm:$0xf]
      %v374 = vld [vmem:[%s3 + $0xc] sm:$0xf]
      %v407 = vunpack.c.l.b16 %v339
      %v408 = vunpack.c.l.b16 %v340
      %v409 = vunpack.c.l.b16 %v341
      %v410 = vunpack.c.l.b16 %v342
      %v411 = vunpack.c.l.b16 %v343
      %v412 = vunpack.c.l.b16 %v344
      %v413 = vunpack.c.l.b16 %v345
      %v414 = vunpack.c.l.b16 %v346
      %v415 = vunpack.c.l.b16 %v347
      %v416 = vunpack.c.l.b16 %v348
      %v417 = vunpack.c.l.b16 %v349
      %v418 = vunpack.c.l.b16 %v350
      %v419 = vunpack.c.l.b16 %v351
      %v420 = vunpack.c.l.b16 %v352
      %v421 = vunpack.c.l.b16 %v353
      %v422 = vunpack.c.l.b16 %v354
      %v423 = vunpack.c.l.b16 %v355
      %v424 = vunpack.c.l.b16 %v356
      %v425 = vunpack.c.l.b16 %v357
      %v426 = vunpack.c.l.b16 %v358
      %v427 = vunpack.c.l.b16 %v359
      %v428 = vunpack.c.l.b16 %v360
      %v429 = vunpack.c.l.b16 %v361
      %v430 = vunpack.c.l.b16 %v362
      %v431 = vunpack.c.l.b16 %v363
      %v432 = vunpack.c.l.b16 %v364
      %v433 = vunpack.c.l.b16 %v365
      %v434 = vunpack.c.l.b16 %v366
      %v435 = vunpack.c.l.b16 %v367
      %v436 = vunpack.c.l.b16 %v368
      %v437 = vunpack.c.l.b16 %v369
      %v438 = vunpack.c.l.b16 %v370
      %v439 = vpack.c.b16 %v408, %v407
      %v440 = vpack.c.b16 %v410, %v409
      %v441 = vpack.c.b16 %v412, %v411
      %v442 = vpack.c.b16 %v414, %v413
      %v443 = vpack.c.b16 %v416, %v415
      %v444 = vpack.c.b16 %v418, %v417
      %v445 = vpack.c.b16 %v420, %v419
      %v446 = vpack.c.b16 %v422, %v421
      %v447 = vpack.c.b16 %v424, %v423
      %v448 = vpack.c.b16 %v426, %v425
      %v449 = vpack.c.b16 %v428, %v427
      %v450 = vpack.c.b16 %v430, %v429
      %v451 = vpack.c.b16 %v432, %v431
      %v452 = vpack.c.b16 %v434, %v433
      %v453 = vpack.c.b16 %v436, %v435
      %v454 = vpack.c.b16 %v438, %v437
      %v459 = vunpack.c.l.b16 %v371
      %v460 = vunpack.c.l.b16 %v372
      %v461 = vunpack.c.l.b16 %v373
      %v462 = vunpack.c.l.b16 %v374
      %v463 = vpack.c.b16 %v460, %v459
      %v464 = vpack.c.b16 %v462, %v461
      %vm467 = vcmask 261120
      %v469 = vsel %vm467, %v439, 0
      %v472 = vsel %vm467, %v440, 0
      %v475 = vsel %vm467, %v441, 0
      %v478 = vsel %vm467, %v442, 0
      %v481 = vsel %vm467, %v443, 0
      %v484 = vsel %vm467, %v444, 0
      %v487 = vsel %vm467, %v445, 0
      %v490 = vsel %vm467, %v446, 0
      %v493 = vsel %vm467, %v447, 0
      %v496 = vsel %vm467, %v448, 0
      %v499 = vsel %vm467, %v449, 0
      %v502 = vsel %vm467, %v450, 0
      %v505 = vsel %vm467, %v451, 0
      %v508 = vsel %vm467, %v452, 0
      %v511 = vsel %vm467, %v453, 0
      %v514 = vsel %vm467, %v454, 0
      %516 = vmatprep.subr.bf16.mxu0 0
      %517 = vmatpush1.bf16.msra.mxu0 %v463
      %518 = vmatprep.subr.bf16.mxu0 0
      %519 = vmatpush1.bf16.msra.mxu0 %v464
      %520 = vmatprep.subr.bf16.mxu0 0
      %521 = vmatpush1.bf16.msra.mxu0 0
      %522 = vmatprep.subr.bf16.mxu0 0
      %523 = vmatpush1.bf16.msra.mxu0 0
      %524 = vmatprep.subr.bf16.mxu0 0
      %525 = vmatpush1.bf16.msra.mxu0 0
      %526 = vmatprep.subr.bf16.mxu0 0
      %527 = vmatpush1.bf16.msra.mxu0 0
      %528 = vmatprep.subr.bf16.mxu0 0
      %529 = vmatpush1.bf16.msra.mxu0 0
      %530 = vmatprep.subr.bf16.mxu0 0
      %531 = vmatpush1.bf16.msra.mxu0 0
      %532 = vmatprep.subr.bf16.mxu0 0
      %533 = vmatpush1.bf16.msra.mxu0 0
      %534 = vmatprep.subr.bf16.mxu0 0
      %535 = vmatpush1.bf16.msra.mxu0 0
      %536 = vmatprep.subr.bf16.mxu0 0
      %537 = vmatpush1.bf16.msra.mxu0 0
      %538 = vmatprep.subr.bf16.mxu0 0
      %539 = vmatpush1.bf16.msra.mxu0 0
      %540 = vmatprep.subr.bf16.mxu0 0
      %541 = vmatpush1.bf16.msra.mxu0 0
      %542 = vmatprep.subr.bf16.mxu0 0
      %543 = vmatpush1.bf16.msra.mxu0 0
      %544 = vmatprep.subr.bf16.mxu0 0
      %545 = vmatpush1.bf16.msra.mxu0 0
      %546 = vmatprep.subr.bf16.mxu0 0
      %547 = vmatpush1.bf16.msra.mxu0 0
      %548 = vmatprep.mubr.bf16.mxu0 0
      %549 = vmatmul.mubr.bf16.gmra.mrb[0].mxu0 %v469
      %v550 = vpop.f32.mrb[0].mxu0
      %v551 = vadd.f32 0.0, %v550
      %v552 = vpop.f32.mrb[0].mxu0
      %v553 = vpop.f32.mrb[0].mxu0
      %v554 = vadd.f32 0.0, %v553
      %v555 = vpop.f32.mrb[0].mxu0
      %556 = vmatprep.mubr.bf16.mxu0 0
      %557 = vmatmul.mubr.bf16.gmra.mrb[0].mxu0 %v472
      %v558 = vpop.f32.mrb[0].mxu0
      %v559 = vadd.f32 0.0, %v558
      %v560 = vpop.f32.mrb[0].mxu0
      %v561 = vpop.f32.mrb[0].mxu0
      %v562 = vadd.f32 0.0, %v561
      %v563 = vpop.f32.mrb[0].mxu0
      %564 = vmatprep.mubr.bf16.mxu0 0
      %565 = vmatmul.mubr.bf16.gmra.mrb[0].mxu0 %v475
      %v566 = vpop.f32.mrb[0].mxu0
      %v567 = vadd.f32 0.0, %v566
      %v568 = vpop.f32.mrb[0].mxu0
      %v569 = vpop.f32.mrb[0].mxu0
      %v570 = vadd.f32 0.0, %v569
      %v571 = vpop.f32.mrb[0].mxu0
      %572 = vmatprep.mubr.bf16.mxu0 0
      %573 = vmatmul.mubr.bf16.gmra.mrb[0].mxu0 %v478
      %v574 = vpop.f32.mrb[0].mxu0
      %v575 = vadd.f32 0.0, %v574
      %v576 = vpop.f32.mrb[0].mxu0
      %v577 = vpop.f32.mrb[0].mxu0
      %v578 = vadd.f32 0.0, %v577
      %v579 = vpop.f32.mrb[0].mxu0
      %580 = vmatprep.mubr.bf16.mxu0 0
      %581 = vmatmul.mubr.bf16.gmra.mrb[0].mxu0 %v481
      %v582 = vpop.f32.mrb[0].mxu0
      %v583 = vadd.f32 0.0, %v582
      %v584 = vpop.f32.mrb[0].mxu0
      %v585 = vpop.f32.mrb[0].mxu0
      %v586 = vadd.f32 0.0, %v585
      %v587 = vpop.f32.mrb[0].mxu0
      %588 = vmatprep.mubr.bf16.mxu0 0
      %589 = vmatmul.mubr.bf16.gmra.mrb[0].mxu0 %v484
      %v590 = vpop.f32.mrb[0].mxu0
      %v591 = vadd.f32 0.0, %v590
      %v592 = vpop.f32.mrb[0].mxu0
      %v593 = vpop.f32.mrb[0].mxu0
      %v594 = vadd.f32 0.0, %v593
      %v595 = vpop.f32.mrb[0].mxu0
      %596 = vmatprep.mubr.bf16.mxu0 0
      %597 = vmatmul.mubr.bf16.gmra.mrb[0].mxu0 %v487
      %v598 = vpop.f32.mrb[0].mxu0
      %v599 = vadd.f32 0.0, %v598
      %v600 = vpop.f32.mrb[0].mxu0
      %v601 = vpop.f32.mrb[0].mxu0
      %v602 = vadd.f32 0.0, %v601
      %v603 = vpop.f32.mrb[0].mxu0
      %604 = vmatprep.mubr.bf16.mxu0 0
      %605 = vmatmul.mubr.bf16.gmra.mrb[0].mxu0 %v490
      %v606 = vpop.f32.mrb[0].mxu0
      %v607 = vadd.f32 0.0, %v606
      %v608 = vpop.f32.mrb[0].mxu0
      %v609 = vpop.f32.mrb[0].mxu0
      %v610 = vadd.f32 0.0, %v609
      %v611 = vpop.f32.mrb[0].mxu0
      %612 = vmatprep.mubr.bf16.mxu0 0
      %613 = vmatmul.mubr.bf16.gmra.mrb[0].mxu0 %v493
      %v614 = vpop.f32.mrb[0].mxu0
      %v615 = vadd.f32 0.0, %v614
      %v616 = vpop.f32.mrb[0].mxu0
      %v617 = vpop.f32.mrb[0].mxu0
      %v618 = vadd.f32 0.0, %v617
      %v619 = vpop.f32.mrb[0].mxu0
      %620 = vmatprep.mubr.bf16.mxu0 0
      %621 = vmatmul.mubr.bf16.gmra.mrb[0].mxu0 %v496
      %v622 = vpop.f32.mrb[0].mxu0
      %v623 = vadd.f32 0.0, %v622
      %v624 = vpop.f32.mrb[0].mxu0
      %v625 = vpop.f32.mrb[0].mxu0
      %v626 = vadd.f32 0.0, %v625
      %v627 = vpop.f32.mrb[0].mxu0
      %628 = vmatprep.mubr.bf16.mxu0 0
      %629 = vmatmul.mubr.bf16.gmra.mrb[0].mxu0 %v499
      %v630 = vpop.f32.mrb[0].mxu0
      %v631 = vadd.f32 0.0, %v630
      %v632 = vpop.f32.mrb[0].mxu0
      %v633 = vpop.f32.mrb[0].mxu0
      %v634 = vadd.f32 0.0, %v633
      %v635 = vpop.f32.mrb[0].mxu0
      %636 = vmatprep.mubr.bf16.mxu0 0
      %637 = vmatmul.mubr.bf16.gmra.mrb[0].mxu0 %v502
      %v638 = vpop.f32.mrb[0].mxu0
      %v639 = vadd.f32 0.0, %v638
      %v640 = vpop.f32.mrb[0].mxu0
      %v641 = vpop.f32.mrb[0].mxu0
      %v642 = vadd.f32 0.0, %v641
      %v643 = vpop.f32.mrb[0].mxu0
      %644 = vmatprep.mubr.bf16.mxu0 0
      %645 = vmatmul.mubr.bf16.gmra.mrb[0].mxu0 %v505
      %v646 = vpop.f32.mrb[0].mxu0
      %v647 = vadd.f32 0.0, %v646
      %v648 = vpop.f32.mrb[0].mxu0
      %v649 = vpop.f32.mrb[0].mxu0
      %v650 = vadd.f32 0.0, %v649
      %v651 = vpop.f32.mrb[0].mxu0
      %652 = vmatprep.mubr.bf16.mxu0 0
      %653 = vmatmul.mubr.bf16.gmra.mrb[0].mxu0 %v508
      %v654 = vpop.f32.mrb[0].mxu0
      %v655 = vadd.f32 0.0, %v654
      %v656 = vpop.f32.mrb[0].mxu0
      %v657 = vpop.f32.mrb[0].mxu0
      %v658 = vadd.f32 0.0, %v657
      %v659 = vpop.f32.mrb[0].mxu0
      %660 = vmatprep.mubr.bf16.mxu0 0
      %661 = vmatmul.mubr.bf16.gmra.mrb[0].mxu0 %v511
      %v662 = vpop.f32.mrb[0].mxu0
      %v663 = vadd.f32 0.0, %v662
      %v664 = vpop.f32.mrb[0].mxu0
      %v665 = vpop.f32.mrb[0].mxu0
      %v666 = vadd.f32 0.0, %v665
      %v667 = vpop.f32.mrb[0].mxu0
      %668 = vmatprep.mubr.bf16.mxu0 0
      %669 = vmatmul.mubr.bf16.gmra.mrb[0].mxu0 %v514
      %v670 = vpop.f32.mrb[0].mxu0
      %v671 = vadd.f32 0.0, %v670
      %v672 = vpop.f32.mrb[0].mxu0
      %v673 = vpop.f32.mrb[0].mxu0
      %v674 = vadd.f32 0.0, %v673
      %v675 = vpop.f32.mrb[0].mxu0
      %676 = vdwg.mxu0
      %v709 = vunpack.c.l.b16 %v303
      %v710 = vunpack.c.l.b16 %v304
      %v711 = vunpack.c.l.b16 %v305
      %v712 = vunpack.c.l.b16 %v306
      %v713 = vunpack.c.l.b16 %v307
      %v714 = vunpack.c.l.b16 %v308
      %v715 = vunpack.c.l.b16 %v309
      %v716 = vunpack.c.l.b16 %v310
      %v717 = vunpack.c.l.b16 %v311
      %v718 = vunpack.c.l.b16 %v312
      %v719 = vunpack.c.l.b16 %v313
      %v720 = vunpack.c.l.b16 %v314
      %v721 = vunpack.c.l.b16 %v315
      %v722 = vunpack.c.l.b16 %v316
      %v723 = vunpack.c.l.b16 %v317
      %v724 = vunpack.c.l.b16 %v318
      %v725 = vunpack.c.l.b16 %v319
      %v726 = vunpack.c.l.b16 %v320
      %v727 = vunpack.c.l.b16 %v321
      %v728 = vunpack.c.l.b16 %v322
      %v729 = vunpack.c.l.b16 %v323
      %v730 = vunpack.c.l.b16 %v324
      %v731 = vunpack.c.l.b16 %v325
      %v732 = vunpack.c.l.b16 %v326
      %v733 = vunpack.c.l.b16 %v327
      %v734 = vunpack.c.l.b16 %v328
      %v735 = vunpack.c.l.b16 %v329
      %v736 = vunpack.c.l.b16 %v330
      %v737 = vunpack.c.l.b16 %v331
      %v738 = vunpack.c.l.b16 %v332
      %v739 = vunpack.c.l.b16 %v333
      %v740 = vunpack.c.l.b16 %v334
      %v741 = vpack.c.b16 %v710, %v709
      %v742 = vpack.c.b16 %v712, %v711
      %v743 = vpack.c.b16 %v714, %v713
      %v744 = vpack.c.b16 %v716, %v715
      %v745 = vpack.c.b16 %v718, %v717
      %v746 = vpack.c.b16 %v720, %v719
      %v747 = vpack.c.b16 %v722, %v721
      %v748 = vpack.c.b16 %v724, %v723
      %v749 = vpack.c.b16 %v726, %v725
      %v750 = vpack.c.b16 %v728, %v727
      %v751 = vpack.c.b16 %v730, %v729
      %v752 = vpack.c.b16 %v732, %v731
      %v753 = vpack.c.b16 %v734, %v733
      %v754 = vpack.c.b16 %v736, %v735
      %v755 = vpack.c.b16 %v738, %v737
      %v756 = vpack.c.b16 %v740, %v739
      %v761 = vunpack.c.l.b16 %v335
      %v762 = vunpack.c.l.b16 %v336
      %v763 = vunpack.c.l.b16 %v337
      %v764 = vunpack.c.l.b16 %v338
      %v765 = vpack.c.b16 %v762, %v761
      %v766 = vpack.c.b16 %v764, %v763
      %v770 = vsel %vm467, %v741, 0
      %v773 = vsel %vm467, %v742, 0
      %v776 = vsel %vm467, %v743, 0
      %v779 = vsel %vm467, %v744, 0
      %v782 = vsel %vm467, %v745, 0
      %v785 = vsel %vm467, %v746, 0
      %v788 = vsel %vm467, %v747, 0
      %v791 = vsel %vm467, %v748, 0
      %v794 = vsel %vm467, %v749, 0
      %v797 = vsel %vm467, %v750, 0
      %v800 = vsel %vm467, %v751, 0
      %v803 = vsel %vm467, %v752, 0
      %v806 = vsel %vm467, %v753, 0
      %v809 = vsel %vm467, %v754, 0
      %v812 = vsel %vm467, %v755, 0
      %v815 = vsel %vm467, %v756, 0
      %817 = vmatprep.subr.bf16.mxu0 0
      %818 = vmatpush1.bf16.msra.mxu0 %v765
      %819 = vmatprep.subr.bf16.mxu0 0
      %820 = vmatpush1.bf16.msra.mxu0 %v766
      %821 = vmatprep.subr.bf16.mxu0 0
      %822 = vmatpush1.bf16.msra.mxu0 0
      %823 = vmatprep.subr.bf16.mxu0 0
      %824 = vmatpush1.bf16.msra.mxu0 0
      %825 = vmatprep.subr.bf16.mxu0 0
      %826 = vmatpush1.bf16.msra.mxu0 0
      %827 = vmatprep.subr.bf16.mxu0 0
      %828 = vmatpush1.bf16.msra.mxu0 0
      %829 = vmatprep.subr.bf16.mxu0 0
      %830 = vmatpush1.bf16.msra.mxu0 0
      %831 = vmatprep.subr.bf16.mxu0 0
      %832 = vmatpush1.bf16.msra.mxu0 0
      %833 = vmatprep.subr.bf16.mxu0 0
      %834 = vmatpush1.bf16.msra.mxu0 0
      %835 = vmatprep.subr.bf16.mxu0 0
      %836 = vmatpush1.bf16.msra.mxu0 0
      %837 = vmatprep.subr.bf16.mxu0 0
      %838 = vmatpush1.bf16.msra.mxu0 0
      %839 = vmatprep.subr.bf16.mxu0 0
      %840 = vmatpush1.bf16.msra.mxu0 0
      %841 = vmatprep.subr.bf16.mxu0 0
      %842 = vmatpush1.bf16.msra.mxu0 0
      %843 = vmatprep.subr.bf16.mxu0 0
      %844 = vmatpush1.bf16.msra.mxu0 0
      %845 = vmatprep.subr.bf16.mxu0 0
      %846 = vmatpush1.bf16.msra.mxu0 0
      %847 = vmatprep.subr.bf16.mxu0 0
      %848 = vmatpush1.bf16.msra.mxu0 0
      %849 = vmatprep.mubr.bf16.mxu0 0
      %850 = vmatmul.mubr.bf16.gmra.mrb[0].mxu0 %v770
      %v851 = vpop.f32.mrb[0].mxu0
      %v852 = vadd.f32 %v551, %v851
      %v853 = vpop.f32.mrb[0].mxu0
      %v854 = vpop.f32.mrb[0].mxu0
      %v855 = vadd.f32 %v554, %v854
      %v856 = vpop.f32.mrb[0].mxu0
      %857 = vmatprep.mubr.bf16.mxu0 0
      %858 = vmatmul.mubr.bf16.gmra.mrb[0].mxu0 %v773
      %v859 = vpop.f32.mrb[0].mxu0
      %v860 = vadd.f32 %v559, %v859
      %v861 = vpop.f32.mrb[0].mxu0
      %v862 = vpop.f32.mrb[0].mxu0
      %v863 = vadd.f32 %v562, %v862
      %v864 = vpop.f32.mrb[0].mxu0
      %865 = vmatprep.mubr.bf16.mxu0 0
      %866 = vmatmul.mubr.bf16.gmra.mrb[0].mxu0 %v776
      %v867 = vpop.f32.mrb[0].mxu0
      %v868 = vadd.f32 %v567, %v867
      %v869 = vpop.f32.mrb[0].mxu0
      %v870 = vpop.f32.mrb[0].mxu0
      %v871 = vadd.f32 %v570, %v870
      %v872 = vpop.f32.mrb[0].mxu0
      %873 = vmatprep.mubr.bf16.mxu0 0
      %874 = vmatmul.mubr.bf16.gmra.mrb[0].mxu0 %v779
      %v875 = vpop.f32.mrb[0].mxu0
      %v876 = vadd.f32 %v575, %v875
      %v877 = vpop.f32.mrb[0].mxu0
      %v878 = vpop.f32.mrb[0].mxu0
      %v879 = vadd.f32 %v578, %v878
      %v880 = vpop.f32.mrb[0].mxu0
      %881 = vmatprep.mubr.bf16.mxu0 0
      %882 = vmatmul.mubr.bf16.gmra.mrb[0].mxu0 %v782
      %v883 = vpop.f32.mrb[0].mxu0
      %v884 = vadd.f32 %v583, %v883
      %v885 = vpop.f32.mrb[0].mxu0
      %v886 = vpop.f32.mrb[0].mxu0
      %v887 = vadd.f32 %v586, %v886
      %v888 = vpop.f32.mrb[0].mxu0
      %889 = vmatprep.mubr.bf16.mxu0 0
      %890 = vmatmul.mubr.bf16.gmra.mrb[0].mxu0 %v785
      %v891 = vpop.f32.mrb[0].mxu0
      %v892 = vadd.f32 %v591, %v891
      %v893 = vpop.f32.mrb[0].mxu0
      %v894 = vpop.f32.mrb[0].mxu0
      %v895 = vadd.f32 %v594, %v894
      %v896 = vpop.f32.mrb[0].mxu0
      %897 = vmatprep.mubr.bf16.mxu0 0
      %898 = vmatmul.mubr.bf16.gmra.mrb[0].mxu0 %v788
      %v899 = vpop.f32.mrb[0].mxu0
      %v900 = vadd.f32 %v599, %v899
      %v901 = vpop.f32.mrb[0].mxu0
      %v902 = vpop.f32.mrb[0].mxu0
      %v903 = vadd.f32 %v602, %v902
      %v904 = vpop.f32.mrb[0].mxu0
      %905 = vmatprep.mubr.bf16.mxu0 0
      %906 = vmatmul.mubr.bf16.gmra.mrb[0].mxu0 %v791
      %v907 = vpop.f32.mrb[0].mxu0
      %v908 = vadd.f32 %v607, %v907
      %v909 = vpop.f32.mrb[0].mxu0
      %v910 = vpop.f32.mrb[0].mxu0
      %v911 = vadd.f32 %v610, %v910
      %v912 = vpop.f32.mrb[0].mxu0
      %913 = vmatprep.mubr.bf16.mxu0 0
      %914 = vmatmul.mubr.bf16.gmra.mrb[0].mxu0 %v794
      %v915 = vpop.f32.mrb[0].mxu0
      %v916 = vadd.f32 %v615, %v915
      %v917 = vpop.f32.mrb[0].mxu0
      %v918 = vpop.f32.mrb[0].mxu0
      %v919 = vadd.f32 %v618, %v918
      %v920 = vpop.f32.mrb[0].mxu0
      %921 = vmatprep.mubr.bf16.mxu0 0
      %922 = vmatmul.mubr.bf16.gmra.mrb[0].mxu0 %v797
      %v923 = vpop.f32.mrb[0].mxu0
      %v924 = vadd.f32 %v623, %v923
      %v925 = vpop.f32.mrb[0].mxu0
      %v926 = vpop.f32.mrb[0].mxu0
      %v927 = vadd.f32 %v626, %v926
      %v928 = vpop.f32.mrb[0].mxu0
      %929 = vmatprep.mubr.bf16.mxu0 0
      %930 = vmatmul.mubr.bf16.gmra.mrb[0].mxu0 %v800
      %v931 = vpop.f32.mrb[0].mxu0
      %v932 = vadd.f32 %v631, %v931
      %v933 = vpop.f32.mrb[0].mxu0
      %v934 = vpop.f32.mrb[0].mxu0
      %v935 = vadd.f32 %v634, %v934
      %v936 = vpop.f32.mrb[0].mxu0
      %937 = vmatprep.mubr.bf16.mxu0 0
      %938 = vmatmul.mubr.bf16.gmra.mrb[0].mxu0 %v803
      %v939 = vpop.f32.mrb[0].mxu0
      %v940 = vadd.f32 %v639, %v939
      %v941 = vpop.f32.mrb[0].mxu0
      %v942 = vpop.f32.mrb[0].mxu0
      %v943 = vadd.f32 %v642, %v942
      %v944 = vpop.f32.mrb[0].mxu0
      %945 = vmatprep.mubr.bf16.mxu0 0
      %946 = vmatmul.mubr.bf16.gmra.mrb[0].mxu0 %v806
      %v947 = vpop.f32.mrb[0].mxu0
      %v948 = vadd.f32 %v647, %v947
      %v949 = vpop.f32.mrb[0].mxu0
      %v950 = vpop.f32.mrb[0].mxu0
      %v951 = vadd.f32 %v650, %v950
      %v952 = vpop.f32.mrb[0].mxu0
      %953 = vmatprep.mubr.bf16.mxu0 0
      %954 = vmatmul.mubr.bf16.gmra.mrb[0].mxu0 %v809
      %v955 = vpop.f32.mrb[0].mxu0
      %v956 = vadd.f32 %v655, %v955
      %v957 = vpop.f32.mrb[0].mxu0
      %v958 = vpop.f32.mrb[0].mxu0
      %v959 = vadd.f32 %v658, %v958
      %v960 = vpop.f32.mrb[0].mxu0
      %961 = vmatprep.mubr.bf16.mxu0 0
      %962 = vmatmul.mubr.bf16.gmra.mrb[0].mxu0 %v812
      %v963 = vpop.f32.mrb[0].mxu0
      %v964 = vadd.f32 %v663, %v963
      %v965 = vpop.f32.mrb[0].mxu0
      %v966 = vpop.f32.mrb[0].mxu0
      %v967 = vadd.f32 %v666, %v966
      %v968 = vpop.f32.mrb[0].mxu0
      %969 = vmatprep.mubr.bf16.mxu0 0
      %970 = vmatmul.mubr.bf16.gmra.mrb[0].mxu0 %v815
      %v971 = vpop.f32.mrb[0].mxu0
      %v972 = vadd.f32 %v671, %v971
      %v973 = vpop.f32.mrb[0].mxu0
      %v974 = vpop.f32.mrb[0].mxu0
      %v975 = vadd.f32 %v674, %v974
      %v976 = vpop.f32.mrb[0].mxu0
      %977 = vdwg.mxu0
      %v978 = vld [vmem:[%s4] sm:$0x1]
      %v980 = vlaneseq
      %v981 = vshrl.u32 %v980, 7
      %v982 = vsub.s32 0, %v981
      %v983 = vrot.slane %v978, %v982
      %v985 = vadd.f32 %v852, %v983
      %v986 = vadd.f32 %v855, %v983
      %v987 = vadd.f32 %v860, %v983
      %v988 = vadd.f32 %v863, %v983
      %v989 = vadd.f32 %v868, %v983
      %v990 = vadd.f32 %v871, %v983
      %v991 = vadd.f32 %v876, %v983
      %v992 = vadd.f32 %v879, %v983
      %v993 = vadd.f32 %v884, %v983
      %v994 = vadd.f32 %v887, %v983
      %v995 = vadd.f32 %v892, %v983
      %v996 = vadd.f32 %v895, %v983
      %v997 = vadd.f32 %v900, %v983
      %v998 = vadd.f32 %v903, %v983
      %v999 = vadd.f32 %v908, %v983
      %v1000 = vadd.f32 %v911, %v983
      %v1001 = vadd.f32 %v916, %v983
      %v1002 = vadd.f32 %v919, %v983
      %v1003 = vadd.f32 %v924, %v983
      %v1004 = vadd.f32 %v927, %v983
      %v1005 = vadd.f32 %v932, %v983
      %v1006 = vadd.f32 %v935, %v983
      %v1007 = vadd.f32 %v940, %v983
      %v1008 = vadd.f32 %v943, %v983
      %v1009 = vadd.f32 %v948, %v983
      %v1010 = vadd.f32 %v951, %v983
      %v1011 = vadd.f32 %v956, %v983
      %v1012 = vadd.f32 %v959, %v983
      %v1013 = vadd.f32 %v964, %v983
      %v1014 = vadd.f32 %v967, %v983
      %v1015 = vadd.f32 %v972, %v983
      %v1016 = vadd.f32 %v975, %v983
      %vm1017 = vcmp.gt.f32.partialorder %v985, 0.0
      %vm1018 = vcmp.gt.f32.partialorder %v986, 0.0
      %vm1019 = vcmp.gt.f32.partialorder %v987, 0.0
      %vm1020 = vcmp.gt.f32.partialorder %v988, 0.0
      %vm1021 = vcmp.gt.f32.partialorder %v989, 0.0
      %vm1022 = vcmp.gt.f32.partialorder %v990, 0.0
      %vm1023 = vcmp.gt.f32.partialorder %v991, 0.0
      %vm1024 = vcmp.gt.f32.partialorder %v992, 0.0
      %vm1025 = vcmp.gt.f32.partialorder %v993, 0.0
      %vm1026 = vcmp.gt.f32.partialorder %v994, 0.0
      %vm1027 = vcmp.gt.f32.partialorder %v995, 0.0
      %vm1028 = vcmp.gt.f32.partialorder %v996, 0.0
      %vm1029 = vcmp.gt.f32.partialorder %v997, 0.0
      %vm1030 = vcmp.gt.f32.partialorder %v998, 0.0
      %vm1031 = vcmp.gt.f32.partialorder %v999, 0.0
      %vm1032 = vcmp.gt.f32.partialorder %v1000, 0.0
      %vm1033 = vcmp.gt.f32.partialorder %v1001, 0.0
      %vm1034 = vcmp.gt.f32.partialorder %v1002, 0.0
      %vm1035 = vcmp.gt.f32.partialorder %v1003, 0.0
      %vm1036 = vcmp.gt.f32.partialorder %v1004, 0.0
      %vm1037 = vcmp.gt.f32.partialorder %v1005, 0.0
      %vm1038 = vcmp.gt.f32.partialorder %v1006, 0.0
      %vm1039 = vcmp.gt.f32.partialorder %v1007, 0.0
      %vm1040 = vcmp.gt.f32.partialorder %v1008, 0.0
      %vm1041 = vcmp.gt.f32.partialorder %v1009, 0.0
      %vm1042 = vcmp.gt.f32.partialorder %v1010, 0.0
      %vm1043 = vcmp.gt.f32.partialorder %v1011, 0.0
      %vm1044 = vcmp.gt.f32.partialorder %v1012, 0.0
      %vm1045 = vcmp.gt.f32.partialorder %v1013, 0.0
      %vm1046 = vcmp.gt.f32.partialorder %v1014, 0.0
      %vm1047 = vcmp.gt.f32.partialorder %v1015, 0.0
      %vm1048 = vcmp.gt.f32.partialorder %v1016, 0.0
      %v1049 = vmul.f32 %v985, 0.01
      %v1050 = vmul.f32 %v986, 0.01
      %v1051 = vmul.f32 %v987, 0.01
      %v1052 = vmul.f32 %v988, 0.01
      %v1053 = vmul.f32 %v989, 0.01
      %v1054 = vmul.f32 %v990, 0.01
      %v1055 = vmul.f32 %v991, 0.01
      %v1056 = vmul.f32 %v992, 0.01
      %v1057 = vmul.f32 %v993, 0.01
      %v1058 = vmul.f32 %v994, 0.01
      %v1059 = vmul.f32 %v995, 0.01
      %v1060 = vmul.f32 %v996, 0.01
      %v1061 = vmul.f32 %v997, 0.01
      %v1062 = vmul.f32 %v998, 0.01
      %v1063 = vmul.f32 %v999, 0.01
      %v1064 = vmul.f32 %v1000, 0.01
      %v1065 = vmul.f32 %v1001, 0.01
      %v1066 = vmul.f32 %v1002, 0.01
      %v1067 = vmul.f32 %v1003, 0.01
      %v1068 = vmul.f32 %v1004, 0.01
      %v1069 = vmul.f32 %v1005, 0.01
      %v1070 = vmul.f32 %v1006, 0.01
      %v1071 = vmul.f32 %v1007, 0.01
      %v1072 = vmul.f32 %v1008, 0.01
      %v1073 = vmul.f32 %v1009, 0.01
      %v1074 = vmul.f32 %v1010, 0.01
      %v1075 = vmul.f32 %v1011, 0.01
      %v1076 = vmul.f32 %v1012, 0.01
      %v1077 = vmul.f32 %v1013, 0.01
      %v1078 = vmul.f32 %v1014, 0.01
      %v1079 = vmul.f32 %v1015, 0.01
      %v1080 = vmul.f32 %v1016, 0.01
      %v1081 = vsel %vm1017, %v985, %v1049
      %v1082 = vsel %vm1018, %v986, %v1050
      %v1083 = vsel %vm1019, %v987, %v1051
      %v1084 = vsel %vm1020, %v988, %v1052
      %v1085 = vsel %vm1021, %v989, %v1053
      %v1086 = vsel %vm1022, %v990, %v1054
      %v1087 = vsel %vm1023, %v991, %v1055
      %v1088 = vsel %vm1024, %v992, %v1056
      %v1089 = vsel %vm1025, %v993, %v1057
      %v1090 = vsel %vm1026, %v994, %v1058
      %v1091 = vsel %vm1027, %v995, %v1059
      %v1092 = vsel %vm1028, %v996, %v1060
      %v1093 = vsel %vm1029, %v997, %v1061
      %v1094 = vsel %vm1030, %v998, %v1062
      %v1095 = vsel %vm1031, %v999, %v1063
      %v1096 = vsel %vm1032, %v1000, %v1064
      %v1097 = vsel %vm1033, %v1001, %v1065
      %v1098 = vsel %vm1034, %v1002, %v1066
      %v1099 = vsel %vm1035, %v1003, %v1067
      %v1100 = vsel %vm1036, %v1004, %v1068
      %v1101 = vsel %vm1037, %v1005, %v1069
      %v1102 = vsel %vm1038, %v1006, %v1070
      %v1103 = vsel %vm1039, %v1007, %v1071
      %v1104 = vsel %vm1040, %v1008, %v1072
      %v1105 = vsel %vm1041, %v1009, %v1073
      %v1106 = vsel %vm1042, %v1010, %v1074
      %v1107 = vsel %vm1043, %v1011, %v1075
      %v1108 = vsel %vm1044, %v1012, %v1076
      %v1109 = vsel %vm1045, %v1013, %v1077
      %v1110 = vsel %vm1046, %v1014, %v1078
      %v1111 = vsel %vm1047, %v1015, %v1079
      %v1112 = vsel %vm1048, %v1016, %v1080
      %1113 = vst [vmem:[%s301] sm:$0xff] %v1081
      %1114 = vst [vmem:[%s301 + $0x8] sm:$0xff] %v1082
      %1115 = vst [vmem:[%s301 + $0x10] sm:$0xff] %v1083
      %1116 = vst [vmem:[%s301 + $0x18] sm:$0xff] %v1084
      %1117 = vst [vmem:[%s301 + $0x20] sm:$0xff] %v1085
      %1118 = vst [vmem:[%s301 + $0x28] sm:$0xff] %v1086
      %1119 = vst [vmem:[%s301 + $0x30] sm:$0xff] %v1087
      %1120 = vst [vmem:[%s301 + $0x38] sm:$0xff] %v1088
      %1121 = vst [vmem:[%s301 + $0x40] sm:$0xff] %v1089
      %1122 = vst [vmem:[%s301 + $0x48] sm:$0xff] %v1090
      %1123 = vst [vmem:[%s301 + $0x50] sm:$0xff] %v1091
      %1124 = vst [vmem:[%s301 + $0x58] sm:$0xff] %v1092
      %1125 = vst [vmem:[%s301 + $0x60] sm:$0xff] %v1093
      %1126 = vst [vmem:[%s301 + $0x68] sm:$0xff] %v1094
      %1127 = vst [vmem:[%s301 + $0x70] sm:$0xff] %v1095
      %1128 = vst [vmem:[%s301 + $0x78] sm:$0xff] %v1096
      %1129 = vst [vmem:[%s301 + $0x80] sm:$0xff] %v1097
      %1130 = vst [vmem:[%s301 + $0x88] sm:$0xff] %v1098
      %1131 = vst [vmem:[%s301 + $0x90] sm:$0xff] %v1099
      %1132 = vst [vmem:[%s301 + $0x98] sm:$0xff] %v1100
      %1133 = vst [vmem:[%s301 + $0xa0] sm:$0xff] %v1101
      %1134 = vst [vmem:[%s301 + $0xa8] sm:$0xff] %v1102
      %1135 = vst [vmem:[%s301 + $0xb0] sm:$0xff] %v1103
      %1136 = vst [vmem:[%s301 + $0xb8] sm:$0xff] %v1104
      %1137 = vst [vmem:[%s301 + $0xc0] sm:$0xff] %v1105
      %1138 = vst [vmem:[%s301 + $0xc8] sm:$0xff] %v1106
      %1139 = vst [vmem:[%s301 + $0xd0] sm:$0xff] %v1107
      %1140 = vst [vmem:[%s301 + $0xd8] sm:$0xff] %v1108
      %1141 = vst [vmem:[%s301 + $0xe0] sm:$0xff] %v1109
      %1142 = vst [vmem:[%s301 + $0xe8] sm:$0xff] %v1110
      %1143 = vst [vmem:[%s301 + $0xf0] sm:$0xff] %v1111
      %1144 = vst [vmem:[%s301 + $0xf8] sm:$0xff] %v1112
      %p1145 = scmp.lt.s32.totalorder %s20, 1
      %s1146 = scalar_select %p1145, %s20, 1
      %p1147 = scmp.lt.s32.totalorder %s21, 2
      %s1148 = scalar_select %p1147, %s21, 2
      %s1149 = smul.addr %s1148, 32
      %s1150 = smul.addr %s1146, 96
      %s1151 = sadd.s32 %s1149, %s1150
      %s1152 = smul.addr %s1151, 8
      %s1153 = scalar_lea.vmem %s5, %s1152
      // Predicated region
      $region41: #{deconv3d_forward.1} parent=39 // pred_check
        %p1154 = pneg %p169
      $region42: #{deconv3d_forward.1} parent=39 // pred_check_branch
        %1156 = sbr.rel (%p1154) target = $region44
      $region43: #{deconv3d_forward.1} parent=39 // pred_region
        _
      $region44: #{deconv3d_forward.1} parent=39 // pred_fallthru
        _
    $region40: #{deconv3d_forward.1} parent=5 // pred_fallthru
      _
    %p1157 = scmp.le.s32.totalorder 2, %s11
    // Predicated region
    $region45: #{deconv3d_forward.1} parent=5 // pred_check
      %p1158 = pneg %p1157
    $region46: #{deconv3d_forward.1} parent=5 // pred_check_branch
      %1160 = sbr.rel (%p1158) target = $region48
    $region47: #{deconv3d_forward.1} parent=5 // pred_region
      %s1161 = ssub.s32 %s11, 2
      // Predicated region
      $region49: #{deconv3d_forward.1} parent=47 // pred_check
        %p1162 = pneg %p175
      $region50: #{deconv3d_forward.1} parent=47 // pred_check_branch
        %1164 = sbr.rel (%p1162) target = $region52
      $region51: #{deconv3d_forward.1} parent=47 // pred_region
        %p1165 = scmp.lt.s32.totalorder %s22, 1
        %s1166 = scalar_select %p1165, %s22, 1
        %p1167 = scmp.lt.s32.totalorder %s23, 2
        %s1168 = scalar_select %p1167, %s23, 2
        %s1169 = smul.addr %s1168, 32
        %s1170 = smul.addr %s1166, 96
        %s1171 = sadd.s32 %s1169, %s1170
        %s1172 = smul.addr %s1171, 8
        %s1173 = scalar_lea.vmem %s5, %s1172
      $region52: #{deconv3d_forward.1} parent=47 // pred_fallthru
        _
    $region48: #{deconv3d_forward.1} parent=5 // pred_fallthru
      _
  $region6: #{deconv3d_forward.1} parent=0 // loop_footer
    %s15 = sadd.s32 1, %s11
  $region7: #{deconv3d_forward.1} parent=0 // loop_footer_branch
    %10 = sbr.rel target = $region3
  $region8: #{deconv3d_forward.1} parent=0 // loop_exit
    _

</llo_original>
